<compile_context>
chip_gen: v7x
topology: tpu7x:2x2x1
jax: 0.10.0
libtpu: 0.0.40
codegen_flags: <defaults>
</compile_context>

<pallas_src>
import functools
import numpy as np

import jax
import jax.numpy as jnp
from jax.experimental import pallas as pl
from jax.experimental.pallas import tpu as pltpu


def _default_vmem_limit():
    """~78% of physical VMEM: ~100 MiB on v5e/v6e (128 MiB), ~50 MiB on v7x (64 MiB)."""
    try:
        info = pltpu.get_tpu_info()
        cap = getattr(info, "vmem_capacity_bytes", None)
        if cap:
            return int(cap * 0.78)
    except Exception:
        pass
    return 48 * 1024 * 1024


_VMEM_LIMIT = _default_vmem_limit()


def _round_up(x, m):
    return ((x + m - 1) // m) * m


def _pick_tile(dim, caps):
    """Largest cap that exactly divides dim, else the full dim (keeps (8,128) rule)."""
    for c in caps:
        if dim >= c and dim % c == 0:
            return c
    return dim


def _batch_block(B):
    """Rows per transformer-layer grid step: amortize per-step overhead (~0.35us) while
    keeping >=2 grid steps so both v7x TensorCores get work."""
    for bb in (8, 4, 2):
        if B % bb == 0 and B // bb >= 2:
            return bb
    return 1


# --------------------------------------------------------------------------
# Pallas kernels
# --------------------------------------------------------------------------
def _linear_kernel(x_ref, w_ref, b_ref, o_ref, acc_ref):
    @pl.when(pl.program_id(2) == 0)
    def _():
        acc_ref[...] = jnp.zeros_like(acc_ref)

    acc_ref[...] += jnp.dot(x_ref[...].astype(jnp.bfloat16), w_ref[...],
                            preferred_element_type=jnp.float32)

    @pl.when(pl.program_id(2) == pl.num_programs(2) - 1)
    def _():
        o_ref[...] = (acc_ref[...] + b_ref[...]).astype(o_ref.dtype)


def _layer_kernel(x_ref, ln1g_ref, ln1b_ref, wqkv_ref, bqkv_ref, wo_ref, bo_ref,
                  ln2g_ref, ln2b_ref, w1_ref, b1_ref, w2_ref, b2_ref, o_ref,
                  *, num_heads):
    """Fused transformer layer on a (Bb, S, D) batch block.

    LN1 -> head-major fused QKV -> per-head attention -> out-proj -> +res
    LN2 -> fc1 -> GELU -> fc2 -> +res
    All matmuls use bf16 operands with f32 accumulation; LN/softmax math in f32.
    """
    Bb = x_ref.shape[0]
    H = num_heads

    # hoist resident weights/biases once (not per batch row)
    ln1g = ln1g_ref[...]
    ln1b = ln1b_ref[...]
    wqkv = wqkv_ref[...]
    bqkv = bqkv_ref[...]
    wo = wo_ref[...]
    bo = bo_ref[...]
    ln2g = ln2g_ref[...]
    ln2b = ln2b_ref[...]
    w1 = w1_ref[...]
    b1 = b1_ref[...]
    w2 = w2_ref[...]
    b2 = b2_ref[...]

    def layer_norm(v, g, b):
        mu = jnp.mean(v, axis=-1, keepdims=True)
        var = jnp.mean((v - mu) ** 2, axis=-1, keepdims=True)
        return (v - mu) * jax.lax.rsqrt(var + 1e-5) * g + b

    for i in range(Bb):
        x = x_ref[i].astype(jnp.float32)                    # (S, D)
        S, D = x.shape
        Dh = D // H
        scale = float(Dh) ** -0.5

        # ---- attention half ----
        xn = layer_norm(x, ln1g, ln1b)
        # head-major fused QKV: columns ordered [h0:q|k|v, h1:q|k|v, ...]
        qkv = jnp.dot(xn.astype(jnp.bfloat16), wqkv,
                      preferred_element_type=jnp.float32) + bqkv      # (S, 3D)

        attn = jnp.zeros((S, D), jnp.float32)
        # TODO(synk): for real-size configs (head_dim >= 128) replace this python
        #             unroll with a head-batched einsum to keep the MXU full.
        for h in range(H):
            base = 3 * h * Dh
            q = qkv[:, base:base + Dh].astype(jnp.bfloat16)
            k = qkv[:, base + Dh:base + 2 * Dh].astype(jnp.bfloat16)
            v = qkv[:, base + 2 * Dh:base + 3 * Dh].astype(jnp.bfloat16)

            s = jax.lax.dot_general(q, k, (((1,), (1,)), ((), ())),
                                    preferred_element_type=jnp.float32) * scale
            s = s - jnp.max(s, axis=-1, keepdims=True)
            p = jnp.exp(s)
            p = p / jnp.sum(p, axis=-1, keepdims=True)       # exact normalization

            o_h = jnp.dot(p.astype(jnp.bfloat16), v,
                          preferred_element_type=jnp.float32)
            # out-proj folded per head: concat(o_h) @ Wo == sum_h o_h @ Wo[h*Dh:(h+1)*Dh]
            attn = attn + jnp.dot(o_h.astype(jnp.bfloat16),
                                  wo[h * Dh:(h + 1) * Dh, :],
                                  preferred_element_type=jnp.float32)

        x = x + attn + bo                                    # f32 residual stream

        # ---- MLP half ----
        xn2 = layer_norm(x, ln2g, ln2b)
        hdn = jnp.dot(xn2.astype(jnp.bfloat16), w1,
                      preferred_element_type=jnp.float32) + b1
        # TODO(synk): PyTorch nn.GELU defaults to exact erf; tanh approximation kept
        #             because the reference Transformer implementation is unspecified.
        hdn = jax.nn.gelu(hdn).astype(jnp.bfloat16)
        # TODO(synk): at real sizes (mlp hidden ~3072) tile the hidden dim here to keep
        #             v7x (64 MiB VMEM) within budget.
        y = jnp.dot(hdn, w2, preferred_element_type=jnp.float32) + b2

        o_ref[i] = (x + y).astype(o_ref.dtype)


def _loss_kernel(pred_ref, tgt_ref, mask_ref, o_ref, num_ref, den_ref):
    """Masked MSE over lane-dense (rows, L*P) slabs with VMEM (1,1) accumulators.

    loss = sum(mask * mean_P(d^2)) / sum(mask) == sum(mask_rep * d^2) / sum(mask_rep)."""
    step = pl.program_id(0)

    @pl.when(step == 0)
    def _():
        num_ref[...] = jnp.zeros_like(num_ref)
        den_ref[...] = jnp.zeros_like(den_ref)

    d = pred_ref[...].astype(jnp.float32) - tgt_ref[...].astype(jnp.float32)
    m = mask_ref[...].astype(jnp.float32)
    num_ref[...] += jnp.sum(d * d * m)
    den_ref[...] += jnp.sum(m)

    @pl.when(step == pl.num_programs(0) - 1)
    def _():
        o_ref[...] = num_ref[...] / den_ref[...]


# --------------------------------------------------------------------------
# Pallas wrappers
# --------------------------------------------------------------------------
def linear(x, w, b_row, *, out_dtype=jnp.float32):
    """x: (..., K) @ w(K, N) + b.  w is pre-cast bf16, b_row is (1, N) f32.

    Rows padded to an 8-aligned tile (fixes non-dividing M); (M, N, K) grid with
    f32 VMEM accumulator, K innermost."""
    orig = x.shape
    K = orig[-1]
    M = int(np.prod(orig[:-1]))
    N = w.shape[1]

    xf = x.reshape(M, K)
    tm = 256 if M >= 256 else _round_up(M, 8)
    Mp = _round_up(M, tm)
    if Mp != M:
        xf = jnp.pad(xf, ((0, Mp - M), (0, 0)))

    tn = _pick_tile(N, (256, 128))
    tk = _pick_tile(K, (512, 256, 128))
    grid = (Mp // tm, N // tn, K // tk)

    out = pl.pallas_call(
        _linear_kernel,
        out_shape=jax.ShapeDtypeStruct((Mp, N), out_dtype),
        grid=grid,
        in_specs=[pl.BlockSpec((tm, tk), lambda i, j, k: (i, k)),
                  pl.BlockSpec((tk, tn), lambda i, j, k: (k, j)),
                  pl.BlockSpec((1, tn), lambda i, j, k: (0, j))],
        out_specs=pl.BlockSpec((tm, tn), lambda i, j, k: (i, j)),
        scratch_shapes=[pltpu.VMEM((tm, tn), jnp.float32)],
        compiler_params=pltpu.CompilerParams(
            dimension_semantics=("parallel", "parallel", "arbitrary"),
            vmem_limit_bytes=_VMEM_LIMIT),
    )(xf, w, b_row)
    if Mp != M:
        out = out[:M]
    return out.reshape(orig[:-1] + (N,))


def transformer_layer(x, blk, num_heads):
    """x: (B, S, D) f32 -> full pre-norm transformer layer, fused in one kernel."""
    B, S, D = x.shape
    Hm = blk["w1"].shape[1]
    Bb = _batch_block(B)
    cw = lambda b: (0, 0)
    # TODO(synk): on v7x, single-buffer the resident weight specs via
    #             pipeline_mode=pl.Buffered(1) to halve their VMEM footprint.
    out = pl.pallas_call(
        functools.partial(_layer_kernel, num_heads=num_heads),
        out_shape=jax.ShapeDtypeStruct((B, S, D), x.dtype),
        grid=(B // Bb,),
        in_specs=[pl.BlockSpec((Bb, S, D), lambda b: (b, 0, 0)),
                  pl.BlockSpec((1, D), cw),          # ln1 gamma
                  pl.BlockSpec((1, D), cw),          # ln1 beta
                  pl.BlockSpec((D, 3 * D), cw),      # fused head-major QKV weight
                  pl.BlockSpec((1, 3 * D), cw),      # fused QKV bias
                  pl.BlockSpec((D, D), cw),          # out-proj weight
                  pl.BlockSpec((1, D), cw),          # out-proj bias
                  pl.BlockSpec((1, D), cw),          # ln2 gamma
                  pl.BlockSpec((1, D), cw),          # ln2 beta
                  pl.BlockSpec((D, Hm), cw),         # fc1 weight
                  pl.BlockSpec((1, Hm), cw),         # fc1 bias
                  pl.BlockSpec((Hm, D), cw),         # fc2 weight
                  pl.BlockSpec((1, D), cw)],         # fc2 bias
        out_specs=pl.BlockSpec((Bb, S, D), lambda b: (b, 0, 0)),
        compiler_params=pltpu.CompilerParams(
            dimension_semantics=("parallel",),
            vmem_limit_bytes=_VMEM_LIMIT),
    )(x, blk["ln1_g"], blk["ln1_b"], blk["wqkv"], blk["bqkv"], blk["wo"], blk["bo"],
      blk["ln2_g"], blk["ln2_b"], blk["w1"], blk["b1"], blk["w2"], blk["b2"])
    return out


def transformer(x, blocks, num_heads):
    for blk in blocks:
        x = transformer_layer(x, blk, num_heads)
    return x


def masked_mse_loss(pred, target, mask):
    """pred/target: (B, L, P); mask: (B, L). Returns scalar masked MSE."""
    B, L, P = pred.shape
    LP = L * P
    pred2 = pred.reshape(B, LP).astype(jnp.float32)          # lane-dense slab
    tgt2 = target.reshape(B, LP).astype(jnp.float32)
    mrep = jnp.repeat(mask.astype(jnp.float32), P, axis=1)   # (B, LP)

    Rp = _round_up(B, 8)
    if Rp != B:                                              # zero rows: mask==0 -> no effect
        padw = ((0, Rp - B), (0, 0))
        pred2 = jnp.pad(pred2, padw)
        tgt2 = jnp.pad(tgt2, padw)
        mrep = jnp.pad(mrep, padw)

    tr = _pick_tile(Rp, (256, 128, 64, 32, 16, 8))
    grid = (Rp // tr,)
    row_spec = pl.BlockSpec((tr, LP), lambda i: (i, 0))

    out = pl.pallas_call(
        _loss_kernel,
        out_shape=jax.ShapeDtypeStruct((1, 1), jnp.float32),
        grid=grid,
        in_specs=[row_spec, row_spec, row_spec],
        out_specs=pl.BlockSpec((1, 1), lambda i: (0, 0)),
        scratch_shapes=[pltpu.VMEM((1, 1), jnp.float32),
                        pltpu.VMEM((1, 1), jnp.float32)],
        compiler_params=pltpu.CompilerParams(
            dimension_semantics=("arbitrary",),
            vmem_limit_bytes=_VMEM_LIMIT),
    )(pred2, tgt2, mrep)
    return out[0, 0]


# --------------------------------------------------------------------------
# Model pieces (glue in plain JAX, compute through the kernels above)
# --------------------------------------------------------------------------
def get_1d_sincos_pos_embed(embed_dim, length, cls_token=False):
    pos = np.arange(length, dtype=np.float64)
    omega = np.arange(embed_dim // 2, dtype=np.float64) / (embed_dim / 2.0)
    omega = 1.0 / (10000.0 ** omega)
    out = np.einsum("m,d->md", pos, omega)
    emb = np.concatenate([np.sin(out), np.cos(out)], axis=1)
    if cls_token:
        emb = np.concatenate([np.zeros([1, embed_dim]), emb], axis=0)
    return jnp.asarray(emb, dtype=jnp.float32)


def patch_embed(x, w_flat, b_row, patch_size):
    """Conv1d(C, E, k=stride=P) as a patch-wise matmul.  x: (B, C, L) -> (B, L//P, E)."""
    B, C, L = x.shape
    num_patches = L // patch_size
    xp = x.reshape(B, C, num_patches, patch_size).transpose(0, 2, 1, 3)
    xp = xp.reshape(B, num_patches, C * patch_size)
    return linear(xp, w_flat, b_row, out_dtype=jnp.float32)


def random_masking(x, mask_ratio, key):
    N, L, D = x.shape
    len_keep = int(L * (1 - mask_ratio))
    noise = jax.random.uniform(key, (N, L))
    ids_shuffle = jnp.argsort(noise, axis=1)
    ids_restore = jnp.argsort(ids_shuffle, axis=1)
    ids_keep = ids_shuffle[:, :len_keep]
    x_masked = jnp.take_along_axis(x, ids_keep[:, :, None], axis=1)
    mask = jnp.ones((N, L), dtype=jnp.float32)
    mask = mask.at[:, :len_keep].set(0.0)
    mask = jnp.take_along_axis(mask, ids_restore, axis=1)
    return x_masked, mask, ids_restore


def mae_forward(params, x, mask_ratio, key, *, signal_length, patch_size, in_chans,
                embed_dim, depth, num_heads, mlp_ratio,
                decoder_embed_dim, decoder_depth):
    num_patches = signal_length // patch_size
    B = x.shape[0]

    # ---------------- encoder ----------------
    tokens = patch_embed(x, params["pe_w_flat"], params["pe_b_row"], patch_size)
    tokens = tokens + params["pos_embed"][:, 1:, :]
    tokens, mask, ids_restore = random_masking(tokens, mask_ratio, key)

    cls_token = params["cls_token"] + params["pos_embed"][:, :1, :]
    cls_tokens = jnp.broadcast_to(cls_token, (B, 1, embed_dim))
    tokens = jnp.concatenate([cls_tokens, tokens], axis=1).astype(jnp.float32)
    latent = transformer(tokens, params["enc_blocks"], num_heads)

    # ---------------- decoder ----------------
    xd = linear(latent, params["dec_embed_w"], params["dec_embed_b_row"],
                out_dtype=jnp.float32)
    n_mask = ids_restore.shape[1] + 1 - xd.shape[1]
    mask_tokens = jnp.broadcast_to(params["mask_token"].astype(jnp.float32),
                                   (B, n_mask, decoder_embed_dim))
    x_ = jnp.concatenate([xd[:, 1:, :], mask_tokens], axis=1)
    x_ = jnp.take_along_axis(x_, ids_restore[:, :, None], axis=1)
    xd = jnp.concatenate([xd[:, :1, :], x_], axis=1)
    xd = transformer(xd, params["dec_blocks"], num_heads)
    # TODO(synk): at real sizes, fuse this tiny (K, patch_size) projection into the
    #             last decoder layer's epilogue (or the loss kernel) to drop a launch.
    pred = linear(xd, params["dec_pred_w"], params["dec_pred_b_row"],
                  out_dtype=jnp.float32)
    pred = pred[:, 1:, :]                                    # (B, L, patch_size)

    # ---------------- loss ----------------
    target = x.reshape(x.shape[0], num_patches, -1)          # patchify
    loss = masked_mse_loss(pred, target, mask)
    return loss, pred, mask


# --------------------------------------------------------------------------
# Deterministic parameter initialization + one-time kernel-side preparation
# --------------------------------------------------------------------------
def _w(key, shape, scale=0.02):
    return scale * jax.random.normal(key, shape, dtype=jnp.float32)


def init_block(key, dim, mlp_ratio):
    ks = jax.random.split(key, 6)
    hidden = dim * mlp_ratio
    return dict(
        ln1_g=jnp.ones((dim,), jnp.float32), ln1_b=jnp.zeros((dim,), jnp.float32),
        wq=_w(ks[0], (dim, dim)), bq=jnp.zeros((dim,), jnp.float32),
        wk=_w(ks[1], (dim, dim)), bk=jnp.zeros((dim,), jnp.float32),
        wv=_w(ks[2], (dim, dim)), bv=jnp.zeros((dim,), jnp.float32),
        wo=_w(ks[3], (dim, dim)), bo=jnp.zeros((dim,), jnp.float32),
        ln2_g=jnp.ones((dim,), jnp.float32), ln2_b=jnp.zeros((dim,), jnp.float32),
        w1=_w(ks[4], (dim, hidden)), b1=jnp.zeros((hidden,), jnp.float32),
        w2=_w(ks[5], (hidden, dim)), b2=jnp.zeros((dim,), jnp.float32),
    )


def init_params(key, *, signal_length, patch_size, in_chans, embed_dim, depth,
                num_heads, mlp_ratio, decoder_embed_dim, decoder_depth):
    num_patches = signal_length // patch_size
    keys = jax.random.split(key, 4 + depth + decoder_depth)
    return dict(
        pe_w=_w(keys[0], (embed_dim, in_chans, patch_size)),
        pe_b=jnp.zeros((embed_dim,), jnp.float32),
        cls_token=jnp.zeros((1, 1, embed_dim), jnp.float32),
        pos_embed=get_1d_sincos_pos_embed(embed_dim, num_patches,
                                          cls_token=True)[None],
        dec_embed_w=_w(keys[1], (embed_dim, decoder_embed_dim)),
        dec_embed_b=jnp.zeros((decoder_embed_dim,), jnp.float32),
        mask_token=jnp.zeros((1, 1, decoder_embed_dim), jnp.float32),
        dec_pred_w=_w(keys[2], (decoder_embed_dim, patch_size)),
        dec_pred_b=jnp.zeros((patch_size,), jnp.float32),
        enc_blocks=[init_block(keys[4 + i], embed_dim, mlp_ratio)
                    for i in range(depth)],
        dec_blocks=[init_block(keys[4 + depth + i], decoder_embed_dim, mlp_ratio)
                    for i in range(decoder_depth)],
    )


def prepare_params(params, *, num_heads):
    """One-time prep: fuse QKV in head-major layout, flatten the conv weight,
    cast all matmul weights to bf16, reshape biases/LN params to (1, N) f32."""
    def prep_block(blk, H):
        D = blk["wq"].shape[0]
        Dh = D // H
        wcols, bcols = [], []
        for h in range(H):
            sl = slice(h * Dh, (h + 1) * Dh)
            wcols += [blk["wq"][:, sl], blk["wk"][:, sl], blk["wv"][:, sl]]
            bcols += [blk["bq"][sl], blk["bk"][sl], blk["bv"][sl]]
        return dict(
            ln1_g=blk["ln1_g"].reshape(1, D), ln1_b=blk["ln1_b"].reshape(1, D),
            wqkv=jnp.concatenate(wcols, axis=1).astype(jnp.bfloat16),
            bqkv=jnp.concatenate(bcols).reshape(1, 3 * D).astype(jnp.float32),
            wo=blk["wo"].astype(jnp.bfloat16), bo=blk["bo"].reshape(1, D),
            ln2_g=blk["ln2_g"].reshape(1, D), ln2_b=blk["ln2_b"].reshape(1, D),
            w1=blk["w1"].astype(jnp.bfloat16), b1=blk["b1"].reshape(1, -1),
            w2=blk["w2"].astype(jnp.bfloat16), b2=blk["b2"].reshape(1, D),
        )

    E = params["pe_w"].shape[0]
    return dict(
        pe_w_flat=params["pe_w"].reshape(E, -1).T.astype(jnp.bfloat16),  # (C*P, E)
        pe_b_row=params["pe_b"].reshape(1, -1).astype(jnp.float32),
        cls_token=params["cls_token"],
        pos_embed=params["pos_embed"],
        dec_embed_w=params["dec_embed_w"].astype(jnp.bfloat16),
        dec_embed_b_row=params["dec_embed_b"].reshape(1, -1).astype(jnp.float32),
        mask_token=params["mask_token"],
        dec_pred_w=params["dec_pred_w"].astype(jnp.bfloat16),
        dec_pred_b_row=params["dec_pred_b"].reshape(1, -1).astype(jnp.float32),
        enc_blocks=[prep_block(b, num_heads) for b in params["enc_blocks"]],
        dec_blocks=[prep_block(b, num_heads) for b in params["dec_blocks"]],
    )


# --------------------------------------------------------------------------
if __name__ == "__main__":
    # Small but lane-friendly config (embed_dim=128 keeps the encoder stream lane-dense).
    cfg = dict(signal_length=256, patch_size=16, in_chans=1, embed_dim=128,
               depth=2, num_heads=4, mlp_ratio=4,
               decoder_embed_dim=64, decoder_depth=2)

    root = jax.random.PRNGKey(0)
    k_param, k_x, k_mask = jax.random.split(root, 3)

    params = prepare_params(init_params(k_param, **cfg), num_heads=cfg["num_heads"])
    x = jax.random.normal(k_x, (2, cfg["in_chans"], cfg["signal_length"]),
                          dtype=jnp.float32)

    loss, pred, mask = mae_forward(params, x, mask_ratio=0.5, key=k_mask, **cfg)
    jax.block_until_ready((loss, pred, mask))

    num_patches = cfg["signal_length"] // cfg["patch_size"]
    assert pred.shape == (2, num_patches, cfg["patch_size"])
    assert mask.shape == (2, num_patches)
    assert loss.shape == ()
    assert bool(jnp.isfinite(loss))
    print("KERNEL_OK")
</pallas_src>

<mosaic_0001>
module attributes {stable_mosaic.version = 11 : i64} {
  func.func @_linear_kernel(%arg0: i32, %arg1: i32, %arg2: i32, %arg3: memref<32x16xf32, #tpu.memory_space<vmem>>, %arg4: memref<16x128xbf16, #tpu.memory_space<vmem>>, %arg5: memref<1x128xf32, #tpu.memory_space<vmem>>, %arg6: memref<32x128xf32, #tpu.memory_space<vmem>>, %arg7: memref<32x128xf32, #tpu.memory_space<vmem>>) attributes {dimension_semantics = [#tpu.dimension_semantics<parallel>, #tpu.dimension_semantics<parallel>, #tpu.dimension_semantics<arbitrary>], iteration_bounds = array<i64: 1, 1, 1>, scalar_prefetch = 0 : i64, scratch_operands = 1 : i64, tpu.core_type = #tpu.core_type<tc>, window_params = [{transform_indices = @transform_0, window_bounds = array<i64: 32, 16>}, {transform_indices = @transform_1, window_bounds = array<i64: 16, 128>}, {transform_indices = @transform_2, window_bounds = array<i64: 1, 128>}, {transform_indices = @transform_3, window_bounds = array<i64: 32, 128>}]} {
    %c0_i32 = arith.constant 0 : i32
    %0 = arith.cmpi eq, %arg2, %c0_i32 : i32
    %1 = arith.extui %0 : i1 to i32
    %c0_i32_0 = arith.constant 0 : i32
    %2 = arith.cmpi ne, %1, %c0_i32_0 : i32
    scf.if %2 {
      %cst_10 = arith.constant 0.000000e+00 : f32
      %13 = vector.broadcast %cst_10 : f32 to vector<32x128xf32>
      %c0_11 = arith.constant 0 : index
      %c0_12 = arith.constant 0 : index
      %14 = vector.load %arg7[%c0_11, %c0_12] : memref<32x128xf32, #tpu.memory_space<vmem>>, vector<32x128xf32>
      tpu.vector_store %arg7[%c0_11, %c0_12], %13 {strides = array<i32>} : memref<32x128xf32, #tpu.memory_space<vmem>>, vector<32x128xf32>,
    } else {
    }
    %c0 = arith.constant 0 : index
    %c0_1 = arith.constant 0 : index
    %3 = vector.load %arg7[%c0, %c0_1] : memref<32x128xf32, #tpu.memory_space<vmem>>, vector<32x128xf32>
    %c0_2 = arith.constant 0 : index
    %c0_3 = arith.constant 0 : index
    %4 = vector.load %arg3[%c0_2, %c0_3] : memref<32x16xf32, #tpu.memory_space<vmem>>, vector<32x16xf32>
    %5 = arith.truncf %4 : vector<32x16xf32> to vector<32x16xbf16>
    %c0_4 = arith.constant 0 : index
    %c0_5 = arith.constant 0 : index
    %6 = vector.load %arg4[%c0_4, %c0_5] : memref<16x128xbf16, #tpu.memory_space<vmem>>, vector<16x128xbf16>
    %cst = arith.constant dense<0.000000e+00> : vector<32x128xf32>
    %7 = tpu.matmul %5, %6, %cst {dimension_numbers = #tpu.dot_dimension_numbers<[1], [0], [0], [1], [0, 0, 1, 1], [], []>} : vector<32x16xbf16>, vector<16x128xbf16>, vector<32x128xf32> -> vector<32x128xf32>
    %8 = arith.addf %3, %7 : vector<32x128xf32>
    %c0_6 = arith.constant 0 : index
    %c0_7 = arith.constant 0 : index
    %9 = vector.load %arg7[%c0_6, %c0_7] : memref<32x128xf32, #tpu.memory_space<vmem>>, vector<32x128xf32>
    tpu.vector_store %arg7[%c0_6, %c0_7], %8 {strides = array<i32>} : memref<32x128xf32, #tpu.memory_space<vmem>>, vector<32x128xf32>,
    %c0_i32_8 = arith.constant 0 : i32
    %10 = arith.cmpi eq, %arg2, %c0_i32_8 : i32
    %11 = arith.extui %10 : i1 to i32
    %c0_i32_9 = arith.constant 0 : i32
    %12 = arith.cmpi ne, %11, %c0_i32_9 : i32
    scf.if %12 {
      %c0_10 = arith.constant 0 : index
      %c0_11 = arith.constant 0 : index
      %13 = vector.load %arg7[%c0_10, %c0_11] : memref<32x128xf32, #tpu.memory_space<vmem>>, vector<32x128xf32>
      %c0_12 = arith.constant 0 : index
      %c0_13 = arith.constant 0 : index
      %14 = vector.load %arg5[%c0_12, %c0_13] : memref<1x128xf32, #tpu.memory_space<vmem>>, vector<1x128xf32>
      %15 = vector.broadcast %14 : vector<1x128xf32> to vector<32x128xf32>
      %16 = arith.addf %13, %15 : vector<32x128xf32>
      %c0_14 = arith.constant 0 : index
      %c0_15 = arith.constant 0 : index
      %17 = vector.load %arg6[%c0_14, %c0_15] : memref<32x128xf32, #tpu.memory_space<vmem>>, vector<32x128xf32>
      tpu.vector_store %arg6[%c0_14, %c0_15], %16 {strides = array<i32>} : memref<32x128xf32, #tpu.memory_space<vmem>>, vector<32x128xf32>,
    } else {
    }
    return
  }
  func.func @transform_0(%arg0: i32, %arg1: i32, %arg2: i32) -> (i32, i32) {
    %c0_i32 = arith.constant 0 : i32
    return %arg0, %arg2 : i32, i32
  }
  func.func @transform_1(%arg0: i32, %arg1: i32, %arg2: i32) -> (i32, i32) {
    %c0_i32 = arith.constant 0 : i32
    return %arg2, %arg1 : i32, i32
  }
  func.func @transform_2(%arg0: i32, %arg1: i32, %arg2: i32) -> (i32, i32) {
    %c0_i32 = arith.constant 0 : i32
    %c0_i32_0 = arith.constant 0 : i32
    return %c0_i32, %arg1 : i32, i32
  }
  func.func @transform_3(%arg0: i32, %arg1: i32, %arg2: i32) -> (i32, i32) {
    %c0_i32 = arith.constant 0 : i32
    return %arg0, %arg1 : i32, i32
  }
}

</mosaic_0001>

<llo_original>
// kernel: tpu_custom_call.1
$region0: #{tpu_custom_call.1}
  #allocation0 [shape = 'u32[]', space=smem, size = 0x4, offset = 0x4, fixed_abs, tag = 'smem constant byte address 0x4 - core index']
  #allocation1 [shape = 'u32[144,128]{1,0:T(1,128)}', space=vmem, size = 0x12000, scoped, tag = 'internal scratch']
  #allocation2 [shape = 'f32[32,128]{1,0:T(8,128)}', space=vmem, size = 0x4000, scoped, tag = 'scratch operand']
  %s0 = inlined_call_operand.vmem [shape: f32[32,16], index: 0, kind: input, shape index: {}]
  %s1 = inlined_call_operand.vmem [shape: bf16[16,128], index: 1, kind: input, shape index: {}]
  %s2 = inlined_call_operand.vmem [shape: f32[1,128], index: 2, kind: input, shape index: {}]
  %s3 = inlined_call_operand.hbm [shape: f32[32,128], index: 3, kind: output, shape index: {}]
  %s4 = sld [smem:[#allocation0]]
  $region30: #{tpu_custom_call.1} parent=0
    _
  %s6 = ssub.s32 1, %s4
  %s7 = scalar_select 0, %s6, %s4
  $region1: #{tpu_custom_call.1} parent=0
    #allocation3 [shape = 'u8[16384]{0}', space=vmem, size = 0x4000, scoped, tag = 'output window, operand 0, single buffered']
    #allocation4 [shape = 's32[1]{0}', space=sflag, size = 0x4, scoped, tag = 'scoped memory for tpu_custom_call.1']
    %8 = vsyncpa [#allocation4], 0
    // Predicated region
    $region2: #{tpu_custom_call.1} parent=1 // pred_check
      _
    $region3: #{tpu_custom_call.1} parent=1 // pred_check_branch
      %10 = sbr.rel (0) target = $region5
    $region4: #{tpu_custom_call.1} parent=1 // pred_region
      _
    $region5: #{tpu_custom_call.1} parent=1 // pred_fallthru
      _
    // Predicated region
    $region6: #{tpu_custom_call.1} parent=1 // pred_check
      _
    $region7: #{tpu_custom_call.1} parent=1 // pred_check_branch
      %12 = sbr.rel (0) target = $region9
    $region8: #{tpu_custom_call.1} parent=1 // pred_region
      _
    $region9: #{tpu_custom_call.1} parent=1 // pred_fallthru
      _
    // Predicated region
    $region10: #{tpu_custom_call.1} parent=1 // pred_check
      _
    $region11: #{tpu_custom_call.1} parent=1 // pred_check_branch
      %14 = sbr.rel (0) target = $region13
    $region12: #{tpu_custom_call.1} parent=1 // pred_region
      _
    $region13: #{tpu_custom_call.1} parent=1 // pred_fallthru
      _
    %p16 = scmp.eq.s32.totalorder 0, 0
    // Predicated region
    $region14: #{tpu_custom_call.1} parent=1 // pred_check
      %p17 = pneg %p16
    $region15: #{tpu_custom_call.1} parent=1 // pred_check_branch
      %19 = sbr.rel (%p17) target = $region17
    $region16: #{tpu_custom_call.1} parent=1 // pred_region
      %20 = vst [vmem:[#allocation2] sm:$0xff] 0.0
      %21 = vst [vmem:[#allocation2 + $0x8] sm:$0xff] 0.0
      %22 = vst [vmem:[#allocation2 + $0x10] sm:$0xff] 0.0
      %23 = vst [vmem:[#allocation2 + $0x18] sm:$0xff] 0.0
    $region17: #{tpu_custom_call.1} parent=1 // pred_fallthru
      _
    %v24 = vld [vmem:[#allocation2] sm:$0xff]
    %v25 = vld [vmem:[#allocation2 + $0x8] sm:$0xff]
    %v26 = vld [vmem:[#allocation2 + $0x10] sm:$0xff]
    %v27 = vld [vmem:[#allocation2 + $0x18] sm:$0xff]
    %v28 = vld [vmem:[%s0] sm:$0xff]
    %v29 = vld [vmem:[%s0 + $0x8] sm:$0xff]
    %v30 = vld [vmem:[%s0 + $0x10] sm:$0xff]
    %v31 = vld [vmem:[%s0 + $0x18] sm:$0xff]
    %v32 = vpack.c.bf16 %v29, %v28
    %v33 = vpack.c.bf16 %v31, %v30
    %v34 = vld [vmem:[%s1] sm:$0xf]
    %v35 = vld [vmem:[%s1 + $0x4] sm:$0xf]
    %v38 = vunpack.c.l.b16 %v34
    %v39 = vunpack.c.l.b16 %v35
    %v40 = vpack.c.b16 %v39, %v38
    %vm42 = vcmask 130048
    %v44 = vsel %vm42, %v32, 0
    %v47 = vsel %vm42, %v33, 0
    %49 = vmatprep.subr.bf16.mxu0 0
    %50 = vmatpush1.bf16.msra.mxu0 %v40
    %51 = vmatprep.subr.bf16.mxu0 0
    %52 = vmatpush1.bf16.msra.mxu0 0
    %53 = vmatprep.subr.bf16.mxu0 0
    %54 = vmatpush1.bf16.msra.mxu0 0
    %55 = vmatprep.subr.bf16.mxu0 0
    %56 = vmatpush1.bf16.msra.mxu0 0
    %57 = vmatprep.subr.bf16.mxu0 0
    %58 = vmatpush1.bf16.msra.mxu0 0
    %59 = vmatprep.subr.bf16.mxu0 0
    %60 = vmatpush1.bf16.msra.mxu0 0
    %61 = vmatprep.subr.bf16.mxu0 0
    %62 = vmatpush1.bf16.msra.mxu0 0
    %63 = vmatprep.subr.bf16.mxu0 0
    %64 = vmatpush1.bf16.msra.mxu0 0
    %65 = vmatprep.subr.bf16.mxu0 0
    %66 = vmatpush1.bf16.msra.mxu0 0
    %67 = vmatprep.subr.bf16.mxu0 0
    %68 = vmatpush1.bf16.msra.mxu0 0
    %69 = vmatprep.subr.bf16.mxu0 0
    %70 = vmatpush1.bf16.msra.mxu0 0
    %71 = vmatprep.subr.bf16.mxu0 0
    %72 = vmatpush1.bf16.msra.mxu0 0
    %73 = vmatprep.subr.bf16.mxu0 0
    %74 = vmatpush1.bf16.msra.mxu0 0
    %75 = vmatprep.subr.bf16.mxu0 0
    %76 = vmatpush1.bf16.msra.mxu0 0
    %77 = vmatprep.subr.bf16.mxu0 0
    %78 = vmatpush1.bf16.msra.mxu0 0
    %79 = vmatprep.subr.bf16.mxu0 0
    %80 = vmatpush1.bf16.msra.mxu0 0
    %81 = vmatprep.mubr.bf16.mxu0 0
    %82 = vmatmul.mubr.bf16.gmra.mrb[0].mxu0 %v44
    %v83 = vpop.f32.mrb[0].mxu0
    %v84 = vadd.f32 0.0, %v83
    %v85 = vpop.f32.mrb[0].mxu0
    %v86 = vpop.f32.mrb[0].mxu0
    %v87 = vadd.f32 0.0, %v86
    %v88 = vpop.f32.mrb[0].mxu0
    %89 = vmatprep.mubr.bf16.mxu0 0
    %90 = vmatmul.mubr.bf16.gmra.mrb[0].mxu0 %v47
    %v91 = vpop.f32.mrb[0].mxu0
    %v92 = vadd.f32 0.0, %v91
    %v93 = vpop.f32.mrb[0].mxu0
    %v94 = vpop.f32.mrb[0].mxu0
    %v95 = vadd.f32 0.0, %v94
    %v96 = vpop.f32.mrb[0].mxu0
    %97 = vdwg.mxu0
    %v98 = vadd.f32 %v24, %v84
    %v99 = vadd.f32 %v25, %v87
    %v100 = vadd.f32 %v26, %v92
    %v101 = vadd.f32 %v27, %v95
    %102 = vst [vmem:[#allocation2] sm:$0xff] %v98
    %103 = vst [vmem:[#allocation2 + $0x8] sm:$0xff] %v99
    %104 = vst [vmem:[#allocation2 + $0x10] sm:$0xff] %v100
    %105 = vst [vmem:[#allocation2 + $0x18] sm:$0xff] %v101
    // Predicated region
    $region18: #{tpu_custom_call.1} parent=1 // pred_check
      %p106 = pneg %p16
    $region19: #{tpu_custom_call.1} parent=1 // pred_check_branch
      %108 = sbr.rel (%p106) target = $region21
    $region20: #{tpu_custom_call.1} parent=1 // pred_region
      %v109 = vld [vmem:[#allocation2] sm:$0xff]
      %v110 = vld [vmem:[#allocation2 + $0x8] sm:$0xff]
      %v111 = vld [vmem:[#allocation2 + $0x10] sm:$0xff]
      %v112 = vld [vmem:[#allocation2 + $0x18] sm:$0xff]
      %v113 = vld [vmem:[%s2] sm:$0x1]
      %v115 = vlaneseq
      %v116 = vshrl.u32 %v115, 7
      %v117 = vsub.s32 0, %v116
      %v118 = vrot.slane %v113, %v117
      %v120 = vadd.f32 %v109, %v118
      %v121 = vadd.f32 %v110, %v118
      %v122 = vadd.f32 %v111, %v118
      %v123 = vadd.f32 %v112, %v118
      %124 = vst [vmem:[#allocation3] sm:$0xff] %v120
      %125 = vst [vmem:[#allocation3 + $0x8] sm:$0xff] %v121
      %126 = vst [vmem:[#allocation3 + $0x10] sm:$0xff] %v122
      %127 = vst [vmem:[#allocation3 + $0x18] sm:$0xff] %v123
    $region21: #{tpu_custom_call.1} parent=1 // pred_fallthru
      _
    // Predicated region
    $region22: #{tpu_custom_call.1} parent=1 // pred_check
      _
    $region23: #{tpu_custom_call.1} parent=1 // pred_check_branch
      %129 = sbr.rel (0) target = $region25
    $region24: #{tpu_custom_call.1} parent=1 // pred_region
      %s131 = ssub.s32 512, 512
      %132 = vsyncadd [#allocation4], %s131
      %s133 = sshll.u32 [#allocation3], 4
      %s134 = int_to_ptr.vmem [resolvable:$true] %s133
      %139 = dma.vmem_to_hbm [thread:$0]  %s134, 512, %s3, [#allocation4], 128, 128, 8
    $region25: #{tpu_custom_call.1} parent=1 // pred_fallthru
      _
    // Predicated region
    $region26: #{tpu_custom_call.1} parent=1 // pred_check
      _
    $region27: #{tpu_custom_call.1} parent=1 // pred_check_branch
      %141 = sbr.rel (0) target = $region29
    $region28: #{tpu_custom_call.1} parent=1 // pred_region
      %142 = dma.done [#allocation4], 512
    $region29: #{tpu_custom_call.1} parent=1 // pred_fallthru
      _
    %143 = vsyncpa [#allocation4], 1

</llo_original>
